<compile_context>
chip_gen: v5e
topology: v5e:2x2
jax: 0.10.0
libtpu: 0.0.40
codegen_flags: <defaults>
</compile_context>

<pallas_src>
import jax
import jax.numpy as jnp
from jax.experimental import pallas as pl
from jax.experimental.pallas import tpu as pltpu

B, CIN, COUT, D, T = 2, 1, 8, 16, 16
KH, KW = 3, 3
EPS = 1e-5
LANES = COUT * T          # 128: lane-dense output width (multiple of 128)


def _multi_tensorcore():
    """True on chips with >1 TensorCore per device (v7x-style)."""
    try:
        kind = jax.devices()[0].device_kind.lower()
    except Exception:
        return False
    return "v7" in kind


def maskconv_kernel(lengths_ref,   # scalar-prefetch SMEM: (B,) int32
                    xpad_ref,      # VMEM: (nb, CIN, D+2, T+2) f32
                    w_ref,         # VMEM: (CIN*KH, T+2, COUT*T) f32 (BN scale folded in)
                    shift_ref,     # VMEM: (1, COUT*T) f32  (bias*scale + BN shift, per lane)
                    tlane_ref,     # VMEM: (1, COUT*T) int32 (lane -> time index t)
                    o_ref):        # VMEM: (nb, D, COUT*T) f32
    nb = o_ref.shape[0]
    b0 = pl.program_id(0) * nb
    shift_row = shift_ref[...]     # (1, LANES), loaded once
    t_of_lane = tlane_ref[...]     # (1, LANES), loaded once

    for i in range(nb):            # static, fully unrolled (nb in {1, B})
        # ---- Conv2d as CIN*KH accumulating MXU matmuls (kw taps folded into rhs) ----
        acc = jnp.zeros((D, LANES), jnp.float32)
        for c in range(CIN):
            for kh in range(KH):
                lhs = xpad_ref[i, c, kh:kh + D, :]        # (D, T+2) sublane-shifted slab
                acc = acc + jnp.dot(lhs, w_ref[c * KH + kh],
                                    preferred_element_type=jnp.float32)
        # ---- folded Conv bias + BatchNorm(eval) affine, then Hardtanh(0, 20) ----
        y = jnp.clip(acc + shift_row, 0.0, 20.0)
        # ---- single mask == masking after every stage (must stay last) ----
        keep = t_of_lane < lengths_ref[b0 + i]            # (1, LANES) bool
        o_ref[i] = jnp.where(keep, y, 0.0).astype(o_ref.dtype)


def _fold_params(w, bias, gamma, beta, running_mean, running_var):
    """Fold Conv bias + eval-mode BatchNorm into matmul weights + a per-lane shift."""
    scale = gamma / jnp.sqrt(running_var + EPS)                   # (COUT,)
    eff_shift = bias * scale + beta - running_mean * scale        # (COUT,)
    w_eff = w * scale[:, None, None, None]                        # (COUT, CIN, KH, KW)
    # taps[kw][u, t] = 1 iff u == t + kw  (selects padded column t+kw for output col t)
    taps = jnp.stack([jnp.eye(T + 2, T, k=-kw, dtype=jnp.float32) for kw in range(KW)])
    # w_all[(c,kh)][u, o*T + t] = sum_kw w_eff[o,c,kh,kw] * taps[kw][u,t]
    w_all = jnp.einsum("ochw,wut->chuot", w_eff, taps).reshape(CIN * KH, T + 2, LANES)
    shift_row = jnp.repeat(eff_shift, T)[None, :]                 # (1, COUT*T)
    return w_all, shift_row


def mask_conv(x, lengths, w, bias, gamma, beta, running_mean, running_var):
    """x: (B, CIN, D, T) f32; lengths: (B,) int32. Returns ((B, COUT, D, T), lengths)."""
    w_all, shift_row = _fold_params(w, bias, gamma, beta, running_mean, running_var)
    t_of_lane = jnp.tile(jnp.arange(T, dtype=jnp.int32), COUT)[None, :]   # (1, COUT*T)

    # padding=1 on both spatial dims (conv itself runs in the kernel).
    # TODO(synk): at real DeepSpeech sizes, handle the 1-pixel halo inside the kernel
    # instead of this wrapper-side jnp.pad (extra HBM round trip of the activation).
    x_pad = jnp.pad(x, ((0, 0), (0, 0), (1, 1), (1, 1)))

    nb = 1 if _multi_tensorcore() else B     # v7x: shard B over TCs; v5e/v6e: one step
    grid = (B // nb,)

    out_flat = pl.pallas_call(
        maskconv_kernel,
        out_shape=jax.ShapeDtypeStruct((B, D, LANES), jnp.float32),
        grid_spec=pltpu.PrefetchScalarGridSpec(
            num_scalar_prefetch=1,
            grid=grid,
            in_specs=[
                pl.BlockSpec((nb, CIN, D + 2, T + 2), lambda g, ln: (g, 0, 0, 0)),
                pl.BlockSpec((CIN * KH, T + 2, LANES), lambda g, ln: (0, 0, 0)),
                pl.BlockSpec((1, LANES), lambda g, ln: (0, 0)),
                pl.BlockSpec((1, LANES), lambda g, ln: (0, 0)),
            ],
            out_specs=pl.BlockSpec((nb, D, LANES), lambda g, ln: (g, 0, 0)),
        ),
        compiler_params=pltpu.CompilerParams(dimension_semantics=("parallel",)),
    )(lengths, x_pad, w_all, shift_row, t_of_lane)

    # lane layout is (o, t): (B, D, COUT*T) -> (B, COUT, D, T)  (wrapper layout plumbing)
    out = out_flat.reshape(B, D, COUT, T).transpose(0, 2, 1, 3)
    return out, lengths


def ref_mask_conv(x, lengths, w, bias, gamma, beta, running_mean, running_var):
    """Direct emulation of the PyTorch MaskConv(Sequential(conv, bn, hardtanh))."""
    def mask(y):
        keep = jnp.arange(y.shape[-1])[None, None, None, :] < lengths[:, None, None, None]
        return jnp.where(keep, y, 0.0)

    y = jax.lax.conv_general_dilated(
        x, w, window_strides=(1, 1), padding=((1, 1), (1, 1)),
        dimension_numbers=("NCHW", "OIHW", "NCHW"),
        precision=jax.lax.Precision.HIGHEST)
    y = y + bias[None, :, None, None]
    y = mask(y)                                                     # mask after Conv2d
    scale = gamma / jnp.sqrt(running_var + EPS)
    y = (y - running_mean[None, :, None, None]) * scale[None, :, None, None] \
        + beta[None, :, None, None]
    y = mask(y)                                                     # mask after BatchNorm2d
    y = jnp.clip(y, 0.0, 20.0)                                      # Hardtanh(0, 20)
    y = mask(y)                                                     # mask after Hardtanh
    return y


if __name__ == "__main__":
    key = jax.random.PRNGKey(0)
    kx, kw_, kb, kg, kbe, km, kv = jax.random.split(key, 7)

    x = jax.random.normal(kx, (B, CIN, D, T), dtype=jnp.float32)
    lengths = jnp.array([T, 9], dtype=jnp.int32)

    # deterministic "checkpoint-free" parameters
    w = jax.random.normal(kw_, (COUT, CIN, KH, KW), dtype=jnp.float32) * 0.3
    bias = jax.random.normal(kb, (COUT,), dtype=jnp.float32) * 0.1
    gamma = 1.0 + 0.1 * jax.random.normal(kg, (COUT,), dtype=jnp.float32)
    beta = 0.1 * jax.random.normal(kbe, (COUT,), dtype=jnp.float32)
    running_mean = 0.1 * jax.random.normal(km, (COUT,), dtype=jnp.float32)
    running_var = 1.0 + jnp.abs(0.1 * jax.random.normal(kv, (COUT,), dtype=jnp.float32))

    out, out_lengths = jax.jit(mask_conv)(x, lengths, w, bias, gamma, beta,
                                          running_mean, running_var)
    out = jax.block_until_ready(out)

    ref = ref_mask_conv(x, lengths, w, bias, gamma, beta, running_mean, running_var)
    assert out.shape == (B, COUT, D, T)
    assert jnp.allclose(out, ref, atol=1e-2, rtol=1e-2), "mismatch vs JAX reference"
    assert jnp.array_equal(out_lengths, lengths)

    print("KERNEL_OK")
</pallas_src>

<mosaic_0001>
module attributes {stable_mosaic.version = 11 : i64} {
  func.func @maskconv_kernel(%arg0: i32, %arg1: memref<2xi32, #tpu.memory_space<smem>>, %arg2: memref<2x1x18x18xf32, #tpu.memory_space<vmem>>, %arg3: memref<3x18x128xf32, #tpu.memory_space<vmem>>, %arg4: memref<1x128xf32, #tpu.memory_space<vmem>>, %arg5: memref<1x128xi32, #tpu.memory_space<vmem>>, %arg6: memref<2x16x128xf32, #tpu.memory_space<vmem>>) attributes {dimension_semantics = [#tpu.dimension_semantics<parallel>], iteration_bounds = array<i64: 1>, scalar_prefetch = 1 : i64, scratch_operands = 0 : i64, tpu.core_type = #tpu.core_type<tc>, window_params = [{transform_indices = @transform_0, window_bounds = array<i64: 2, 1, 18, 18>}, {pipeline_mode = #tpu.pipeline_mode<synchronous>, transform_indices = @transform_1, window_bounds = array<i64: 3, 18, 128>}, {pipeline_mode = #tpu.pipeline_mode<synchronous>, transform_indices = @transform_2, window_bounds = array<i64: 1, 128>}, {pipeline_mode = #tpu.pipeline_mode<synchronous>, transform_indices = @transform_3, window_bounds = array<i64: 1, 128>}, {transform_indices = @transform_4, window_bounds = array<i64: 2, 16, 128>}]} {
    %c2_i32 = arith.constant 2 : i32
    %0 = arith.muli %arg0, %c2_i32 : i32
    %c0 = arith.constant 0 : index
    %c0_0 = arith.constant 0 : index
    %1 = vector.load %arg4[%c0, %c0_0] : memref<1x128xf32, #tpu.memory_space<vmem>>, vector<1x128xf32>
    %c0_1 = arith.constant 0 : index
    %c0_2 = arith.constant 0 : index
    %2 = vector.load %arg5[%c0_1, %c0_2] : memref<1x128xi32, #tpu.memory_space<vmem>>, vector<1x128xi32>
    %cst = arith.constant 0.000000e+00 : f32
    %3 = vector.broadcast %cst : f32 to vector<16x128xf32>
    %c0_3 = arith.constant 0 : index
    %c0_4 = arith.constant 0 : index
    %c0_5 = arith.constant 0 : index
    %c0_6 = arith.constant 0 : index
    %4 = vector.load %arg2[%c0_3, %c0_4, %c0_5, %c0_6] : memref<2x1x18x18xf32, #tpu.memory_space<vmem>>, vector<1x1x16x18xf32>
    %5 = vector.shape_cast %4 : vector<1x1x16x18xf32> to vector<16x18xf32>
    %c0_7 = arith.constant 0 : index
    %c0_8 = arith.constant 0 : index
    %c0_9 = arith.constant 0 : index
    %6 = vector.load %arg3[%c0_7, %c0_8, %c0_9] : memref<3x18x128xf32, #tpu.memory_space<vmem>>, vector<1x18x128xf32>
    %7 = vector.shape_cast %6 : vector<1x18x128xf32> to vector<18x128xf32>
    %cst_10 = arith.constant dense<0.000000e+00> : vector<16x128xf32>
    %8 = tpu.matmul %5, %7, %cst_10 {dimension_numbers = #tpu.dot_dimension_numbers<[1], [0], [0], [1], [0, 0, 1, 1], [], []>} : vector<16x18xf32>, vector<18x128xf32>, vector<16x128xf32> -> vector<16x128xf32>
    %9 = arith.addf %3, %8 : vector<16x128xf32>
    %c0_11 = arith.constant 0 : index
    %c0_12 = arith.constant 0 : index
    %c1 = arith.constant 1 : index
    %c0_13 = arith.constant 0 : index
    %10 = vector.load %arg2[%c0_11, %c0_12, %c1, %c0_13] : memref<2x1x18x18xf32, #tpu.memory_space<vmem>>, vector<1x1x16x18xf32>
    %11 = vector.shape_cast %10 : vector<1x1x16x18xf32> to vector<16x18xf32>
    %c1_14 = arith.constant 1 : index
    %c0_15 = arith.constant 0 : index
    %c0_16 = arith.constant 0 : index
    %12 = vector.load %arg3[%c1_14, %c0_15, %c0_16] : memref<3x18x128xf32, #tpu.memory_space<vmem>>, vector<1x18x128xf32>
    %13 = vector.shape_cast %12 : vector<1x18x128xf32> to vector<18x128xf32>
    %cst_17 = arith.constant dense<0.000000e+00> : vector<16x128xf32>
    %14 = tpu.matmul %11, %13, %cst_17 {dimension_numbers = #tpu.dot_dimension_numbers<[1], [0], [0], [1], [0, 0, 1, 1], [], []>} : vector<16x18xf32>, vector<18x128xf32>, vector<16x128xf32> -> vector<16x128xf32>
    %15 = arith.addf %9, %14 : vector<16x128xf32>
    %c0_18 = arith.constant 0 : index
    %c0_19 = arith.constant 0 : index
    %c2 = arith.constant 2 : index
    %c0_20 = arith.constant 0 : index
    %16 = vector.load %arg2[%c0_18, %c0_19, %c2, %c0_20] : memref<2x1x18x18xf32, #tpu.memory_space<vmem>>, vector<1x1x16x18xf32>
    %17 = vector.shape_cast %16 : vector<1x1x16x18xf32> to vector<16x18xf32>
    %c2_21 = arith.constant 2 : index
    %c0_22 = arith.constant 0 : index
    %c0_23 = arith.constant 0 : index
    %18 = vector.load %arg3[%c2_21, %c0_22, %c0_23] : memref<3x18x128xf32, #tpu.memory_space<vmem>>, vector<1x18x128xf32>
    %19 = vector.shape_cast %18 : vector<1x18x128xf32> to vector<18x128xf32>
    %cst_24 = arith.constant dense<0.000000e+00> : vector<16x128xf32>
    %20 = tpu.matmul %17, %19, %cst_24 {dimension_numbers = #tpu.dot_dimension_numbers<[1], [0], [0], [1], [0, 0, 1, 1], [], []>} : vector<16x18xf32>, vector<18x128xf32>, vector<16x128xf32> -> vector<16x128xf32>
    %21 = arith.addf %15, %20 : vector<16x128xf32>
    %22 = vector.broadcast %1 : vector<1x128xf32> to vector<16x128xf32>
    %23 = arith.addf %21, %22 : vector<16x128xf32>
    %cst_25 = arith.constant 0.000000e+00 : f32
    %cst_26 = arith.constant 2.000000e+01 : f32
    %24 = vector.broadcast %cst_25 : f32 to vector<16x128xf32>
    %25 = arith.maximumf %24, %23 : vector<16x128xf32>
    %26 = vector.broadcast %cst_26 : f32 to vector<16x128xf32>
    %27 = arith.minimumf %26, %25 : vector<16x128xf32>
    %c0_i32 = arith.constant 0 : i32
    %28 = arith.addi %0, %c0_i32 : i32
    %29 = arith.index_cast %28 : i32 to index
    %30 = memref.load %arg1[%29] : memref<2xi32, #tpu.memory_space<smem>>
    %31 = vector.broadcast %30 : i32 to vector<1x128xi32>
    %32 = arith.cmpi slt, %2, %31 : vector<1x128xi32>
    %cst_27 = arith.constant 0.000000e+00 : f32
    %33 = vector.shape_cast %32 : vector<1x128xi1> to vector<1x128xi1>
    %34 = vector.broadcast %33 : vector<1x128xi1> to vector<16x128xi1>
    %35 = vector.broadcast %cst_27 : f32 to vector<16x128xf32>
    %36 = arith.select %34, %27, %35 : vector<16x128xi1>, vector<16x128xf32>
    %c0_28 = arith.constant 0 : index
    %c0_29 = arith.constant 0 : index
    %c0_30 = arith.constant 0 : index
    %37 = vector.load %arg6[%c0_28, %c0_29, %c0_30] : memref<2x16x128xf32, #tpu.memory_space<vmem>>, vector<1x16x128xf32>
    %38 = vector.shape_cast %37 : vector<1x16x128xf32> to vector<16x128xf32>
    %39 = vector.shape_cast %36 : vector<16x128xf32> to vector<1x16x128xf32>
    tpu.vector_store %arg6[%c0_28, %c0_29, %c0_30], %39 {strides = array<i32>} : memref<2x16x128xf32, #tpu.memory_space<vmem>>, vector<1x16x128xf32>,
    %cst_31 = arith.constant 0.000000e+00 : f32
    %40 = vector.broadcast %cst_31 : f32 to vector<16x128xf32>
    %c1_32 = arith.constant 1 : index
    %c0_33 = arith.constant 0 : index
    %c0_34 = arith.constant 0 : index
    %c0_35 = arith.constant 0 : index
    %41 = vector.load %arg2[%c1_32, %c0_33, %c0_34, %c0_35] : memref<2x1x18x18xf32, #tpu.memory_space<vmem>>, vector<1x1x16x18xf32>
    %42 = vector.shape_cast %41 : vector<1x1x16x18xf32> to vector<16x18xf32>
    %c0_36 = arith.constant 0 : index
    %c0_37 = arith.constant 0 : index
    %c0_38 = arith.constant 0 : index
    %43 = vector.load %arg3[%c0_36, %c0_37, %c0_38] : memref<3x18x128xf32, #tpu.memory_space<vmem>>, vector<1x18x128xf32>
    %44 = vector.shape_cast %43 : vector<1x18x128xf32> to vector<18x128xf32>
    %cst_39 = arith.constant dense<0.000000e+00> : vector<16x128xf32>
    %45 = tpu.matmul %42, %44, %cst_39 {dimension_numbers = #tpu.dot_dimension_numbers<[1], [0], [0], [1], [0, 0, 1, 1], [], []>} : vector<16x18xf32>, vector<18x128xf32>, vector<16x128xf32> -> vector<16x128xf32>
    %46 = arith.addf %40, %45 : vector<16x128xf32>
    %c1_40 = arith.constant 1 : index
    %c0_41 = arith.constant 0 : index
    %c1_42 = arith.constant 1 : index
    %c0_43 = arith.constant 0 : index
    %47 = vector.load %arg2[%c1_40, %c0_41, %c1_42, %c0_43] : memref<2x1x18x18xf32, #tpu.memory_space<vmem>>, vector<1x1x16x18xf32>
    %48 = vector.shape_cast %47 : vector<1x1x16x18xf32> to vector<16x18xf32>
    %c1_44 = arith.constant 1 : index
    %c0_45 = arith.constant 0 : index
    %c0_46 = arith.constant 0 : index
    %49 = vector.load %arg3[%c1_44, %c0_45, %c0_46] : memref<3x18x128xf32, #tpu.memory_space<vmem>>, vector<1x18x128xf32>
    %50 = vector.shape_cast %49 : vector<1x18x128xf32> to vector<18x128xf32>
    %cst_47 = arith.constant dense<0.000000e+00> : vector<16x128xf32>
    %51 = tpu.matmul %48, %50, %cst_47 {dimension_numbers = #tpu.dot_dimension_numbers<[1], [0], [0], [1], [0, 0, 1, 1], [], []>} : vector<16x18xf32>, vector<18x128xf32>, vector<16x128xf32> -> vector<16x128xf32>
    %52 = arith.addf %46, %51 : vector<16x128xf32>
    %c1_48 = arith.constant 1 : index
    %c0_49 = arith.constant 0 : index
    %c2_50 = arith.constant 2 : index
    %c0_51 = arith.constant 0 : index
    %53 = vector.load %arg2[%c1_48, %c0_49, %c2_50, %c0_51] : memref<2x1x18x18xf32, #tpu.memory_space<vmem>>, vector<1x1x16x18xf32>
    %54 = vector.shape_cast %53 : vector<1x1x16x18xf32> to vector<16x18xf32>
    %c2_52 = arith.constant 2 : index
    %c0_53 = arith.constant 0 : index
    %c0_54 = arith.constant 0 : index
    %55 = vector.load %arg3[%c2_52, %c0_53, %c0_54] : memref<3x18x128xf32, #tpu.memory_space<vmem>>, vector<1x18x128xf32>
    %56 = vector.shape_cast %55 : vector<1x18x128xf32> to vector<18x128xf32>
    %cst_55 = arith.constant dense<0.000000e+00> : vector<16x128xf32>
    %57 = tpu.matmul %54, %56, %cst_55 {dimension_numbers = #tpu.dot_dimension_numbers<[1], [0], [0], [1], [0, 0, 1, 1], [], []>} : vector<16x18xf32>, vector<18x128xf32>, vector<16x128xf32> -> vector<16x128xf32>
    %58 = arith.addf %52, %57 : vector<16x128xf32>
    %59 = vector.broadcast %1 : vector<1x128xf32> to vector<16x128xf32>
    %60 = arith.addf %58, %59 : vector<16x128xf32>
    %cst_56 = arith.constant 0.000000e+00 : f32
    %cst_57 = arith.constant 2.000000e+01 : f32
    %61 = vector.broadcast %cst_56 : f32 to vector<16x128xf32>
    %62 = arith.maximumf %61, %60 : vector<16x128xf32>
    %63 = vector.broadcast %cst_57 : f32 to vector<16x128xf32>
    %64 = arith.minimumf %63, %62 : vector<16x128xf32>
    %c1_i32 = arith.constant 1 : i32
    %65 = arith.addi %0, %c1_i32 : i32
    %66 = arith.index_cast %65 : i32 to index
    %67 = memref.load %arg1[%66] : memref<2xi32, #tpu.memory_space<smem>>
    %68 = vector.broadcast %67 : i32 to vector<1x128xi32>
    %69 = arith.cmpi slt, %2, %68 : vector<1x128xi32>
    %cst_58 = arith.constant 0.000000e+00 : f32
    %70 = vector.shape_cast %69 : vector<1x128xi1> to vector<1x128xi1>
    %71 = vector.broadcast %70 : vector<1x128xi1> to vector<16x128xi1>
    %72 = vector.broadcast %cst_58 : f32 to vector<16x128xf32>
    %73 = arith.select %71, %64, %72 : vector<16x128xi1>, vector<16x128xf32>
    %c1_59 = arith.constant 1 : index
    %c0_60 = arith.constant 0 : index
    %c0_61 = arith.constant 0 : index
    %74 = vector.load %arg6[%c1_59, %c0_60, %c0_61] : memref<2x16x128xf32, #tpu.memory_space<vmem>>, vector<1x16x128xf32>
    %75 = vector.shape_cast %74 : vector<1x16x128xf32> to vector<16x128xf32>
    %76 = vector.shape_cast %73 : vector<16x128xf32> to vector<1x16x128xf32>
    tpu.vector_store %arg6[%c1_59, %c0_60, %c0_61], %76 {strides = array<i32>} : memref<2x16x128xf32, #tpu.memory_space<vmem>>, vector<1x16x128xf32>,
    return
  }
  func.func @transform_0(%arg0: i32, %arg1: memref<2xi32, #tpu.memory_space<smem>>) -> (i32, i32, i32, i32) {
    %c0_i32 = arith.constant 0 : i32
    %c0_i32_0 = arith.constant 0 : i32
    %c0_i32_1 = arith.constant 0 : i32
    %c0_i32_2 = arith.constant 0 : i32
    return %arg0, %c0_i32, %c0_i32_0, %c0_i32_1 : i32, i32, i32, i32
  }
  func.func @transform_1(%arg0: i32, %arg1: memref<2xi32, #tpu.memory_space<smem>>) -> (i32, i32, i32) {
    %c0_i32 = arith.constant 0 : i32
    %c0_i32_0 = arith.constant 0 : i32
    %c0_i32_1 = arith.constant 0 : i32
    %c0_i32_2 = arith.constant 0 : i32
    return %c0_i32, %c0_i32_0, %c0_i32_1 : i32, i32, i32
  }
  func.func @transform_2(%arg0: i32, %arg1: memref<2xi32, #tpu.memory_space<smem>>) -> (i32, i32) {
    %c0_i32 = arith.constant 0 : i32
    %c0_i32_0 = arith.constant 0 : i32
    %c0_i32_1 = arith.constant 0 : i32
    return %c0_i32, %c0_i32_0 : i32, i32
  }
  func.func @transform_3(%arg0: i32, %arg1: memref<2xi32, #tpu.memory_space<smem>>) -> (i32, i32) {
    %c0_i32 = arith.constant 0 : i32
    %c0_i32_0 = arith.constant 0 : i32
    %c0_i32_1 = arith.constant 0 : i32
    return %c0_i32, %c0_i32_0 : i32, i32
  }
  func.func @transform_4(%arg0: i32, %arg1: memref<2xi32, #tpu.memory_space<smem>>) -> (i32, i32, i32) {
    %c0_i32 = arith.constant 0 : i32
    %c0_i32_0 = arith.constant 0 : i32
    %c0_i32_1 = arith.constant 0 : i32
    return %arg0, %c0_i32, %c0_i32_0 : i32, i32, i32
  }
}

</mosaic_0001>

<llo_original>
// kernel: tile.9
$region0: #{tile.9}
  %s0 = inlined_call_operand.vmem [shape: s32[8,16], index: 0, kind: input, shape index: {}]
  %s1 = inlined_call_operand.vmem [shape: s32[1,128], index: 1, kind: output, shape index: {}]
  $region1: #{tile.9} parent=0
    #allocation0 [shape = 'u8[4096]{0}', space=vmem, size = 0x1000, scoped, tag = 'scoped mem for output reshape']
    %v2 = vld [vmem:[%s0] sm:$0x1]
    %vm3 = vcmask 130048
    %4 = vst.msk [vmem:[#allocation0] sm:$0x1] %vm3, %v2
    %s5 = scalar_lea.vmem %s0, 7
    %v6 = vld [vmem:[%s5] sm:$0x1]
    %7 = vrot.lane.b32.xlu0 %v6, 112
    %v8 = vpop.permute.xlu0 %7
    %vm9 = vcmask 1048448
    %10 = vst.msk [vmem:[#allocation0] sm:$0x1] %vm9, %v8
    %s11 = scalar_lea.vmem %s0, 6
    %v12 = vld [vmem:[%s11] sm:$0x1]
    %13 = vrot.lane.b32.xlu0 %v12, 96
    %v14 = vpop.permute.xlu0 %13
    %vm15 = vcmask 917248
    %16 = vst.msk [vmem:[#allocation0] sm:$0x1] %vm15, %v14
    %s17 = scalar_lea.vmem %s0, 5
    %v18 = vld [vmem:[%s17] sm:$0x1]
    %19 = vrot.lane.b32.xlu0 %v18, 80
    %v20 = vpop.permute.xlu0 %19
    %vm21 = vcmask 786048
    %22 = vst.msk [vmem:[#allocation0] sm:$0x1] %vm21, %v20
    %s23 = scalar_lea.vmem %s0, 4
    %v24 = vld [vmem:[%s23] sm:$0x1]
    %25 = vrot.lane.b32.xlu0 %v24, 64
    %v26 = vpop.permute.xlu0 %25
    %vm27 = vcmask 654848
    %28 = vst.msk [vmem:[#allocation0] sm:$0x1] %vm27, %v26
    %s29 = scalar_lea.vmem %s0, 3
    %v30 = vld [vmem:[%s29] sm:$0x1]
    %31 = vrot.lane.b32.xlu0 %v30, 48
    %v32 = vpop.permute.xlu0 %31
    %vm33 = vcmask 523648
    %34 = vst.msk [vmem:[#allocation0] sm:$0x1] %vm33, %v32
    %s35 = scalar_lea.vmem %s0, 2
    %v36 = vld [vmem:[%s35] sm:$0x1]
    %37 = vrot.lane.b32.xlu0 %v36, 32
    %v38 = vpop.permute.xlu0 %37
    %vm39 = vcmask 392448
    %40 = vst.msk [vmem:[#allocation0] sm:$0x1] %vm39, %v38
    %s41 = scalar_lea.vmem %s0, 1
    %v42 = vld [vmem:[%s41] sm:$0x1]
    %43 = vrot.lane.b32.xlu0 %v42, 16
    %v44 = vpop.permute.xlu0 %43
    %vm45 = vcmask 261248
    %46 = vst.msk [vmem:[#allocation0] sm:$0x1] %vm45, %v44
    %s48 = ssub.s32 2, 1
    %v49 = vld [vmem:[#allocation0] sm:%s48]
    %s51 = ssub.s32 2, 1
    %52 = vst [vmem:[%s1] sm:%s51] %v49

// kernel: mask_conv.1
$region0: #{mask_conv.1}
  #allocation0 [shape = 'u32[]', space=smem, size = 0x4, offset = 0x4, fixed_abs, tag = 'smem constant byte address 0x4 - core index']
  #allocation1 [shape = 'u32[72,128]{1,0:T(1,128)}', space=vmem, size = 0x9000, scoped, tag = 'internal scratch']
  #allocation2 [shape = 's32[1]{0}', space=sflag, size = 0x4, scoped, tag = 'scoped memory for mask_conv.1']
  #allocation3 [shape = 'u8[512]{0}', space=smem, size = 0x200, scoped, tag = 'prefetched SMEM operand 0']
  %s0 = inlined_call_operand.vmem [shape: s32[2], index: 0, kind: input, shape index: {}]
  %s1 = inlined_call_operand.vmem [shape: f32[2,1,18,18], index: 1, kind: input, shape index: {}]
  %s2 = inlined_call_operand.vmem [shape: f32[3,18,128], index: 2, kind: input, shape index: {}]
  %s3 = inlined_call_operand.vmem [shape: f32[1,128], index: 3, kind: input, shape index: {}]
  %s4 = inlined_call_operand.vmem [shape: s32[1,128], index: 4, kind: input, shape index: {}]
  %s5 = inlined_call_operand.vmem [shape: f32[2,16,128], index: 5, kind: output, shape index: {}]
  %s6 = sld [smem:[#allocation0]]
  $region26: #{mask_conv.1} parent=0
    _
  %s8 = ssub.s32 1, %s6
  %s9 = scalar_select 0, %s8, %s6
  %s11 = sshll.u32 %s0, 4
  %s12 = int_to_ptr.vmem [resolvable:$true] %s11
  %14 = dma.vmem_to_smem %s12, 16, [#allocation3], [#allocation2]
  %16 = dma.done [#allocation2], 16
  %17 = sfence
  // Predicated region
  $region2: #{mask_conv.1} parent=0 // pred_check
    _
  $region3: #{mask_conv.1} parent=0 // pred_check_branch
    %19 = sbr.rel (0) target = $region5
  $region4: #{mask_conv.1} parent=0 // pred_region
    _
  $region5: #{mask_conv.1} parent=0 // pred_fallthru
    _
  // Predicated region
  $region6: #{mask_conv.1} parent=0 // pred_check
    _
  $region7: #{mask_conv.1} parent=0 // pred_check_branch
    %21 = sbr.rel (0) target = $region9
  $region8: #{mask_conv.1} parent=0 // pred_region
    _
  $region9: #{mask_conv.1} parent=0 // pred_fallthru
    _
  // Predicated region
  $region10: #{mask_conv.1} parent=0 // pred_check
    _
  $region11: #{mask_conv.1} parent=0 // pred_check_branch
    %23 = sbr.rel (0) target = $region13
  $region12: #{mask_conv.1} parent=0 // pred_region
    _
  $region13: #{mask_conv.1} parent=0 // pred_fallthru
    _
  // Predicated region
  $region14: #{mask_conv.1} parent=0 // pred_check
    _
  $region15: #{mask_conv.1} parent=0 // pred_check_branch
    %25 = sbr.rel (0) target = $region17
  $region16: #{mask_conv.1} parent=0 // pred_region
    _
  $region17: #{mask_conv.1} parent=0 // pred_fallthru
    _
  %s26 = smul.u32 0, 2
  %v27 = vld [vmem:[%s3] sm:$0x1]
  %v28 = vld [vmem:[%s4] sm:$0x1]
  %v29 = vld [vmem:[%s1] sm:$0xff]
  %v30 = vld [vmem:[%s1 + $0x8] sm:$0xff]
  %v31 = vld [vmem:[%s2] sm:$0xff]
  %v32 = vld [vmem:[%s2 + $0x8] sm:$0xff]
  %v33 = vld [vmem:[%s2 + $0x10] sm:$0x3]
  %v34 = vld [vmem:[%s1 + $0x1] sm:$0xff]
  %v35 = vld [vmem:[%s1 + $0x9] sm:$0xff]
  %s36 = scalar_lea.vmem %s2, 24
  %v37 = vld [vmem:[%s36] sm:$0xff]
  %v38 = vld [vmem:[%s36 + $0x8] sm:$0xff]
  %v39 = vld [vmem:[%s36 + $0x10] sm:$0x3]
  %vm40 = vcmask 146432
  %v42 = vsel %vm40, %v34, 0
  %v45 = vsel %vm40, %v35, 0
  %vm47 = vcmask 1041408
  %v49 = vsel %vm47, %v39, 0
  %51 = vmatpush.msra.mxu0 0.0
  %52 = vmatpush.msra.mxu0 0.0
  %53 = vmatpush.msra.mxu0 0.0
  %54 = vmatpush.msra.mxu0 0.0
  %55 = vmatpush.msra.mxu0 0.0
  %56 = vmatpush.msra.mxu0 0.0
  %57 = vmatpush.msra.mxu0 0.0
  %58 = vmatpush.msra.mxu0 0.0
  %59 = vmatpush.msra.mxu0 0.0
  %60 = vmatpush.msra.mxu0 0.0
  %61 = vmatpush.msra.mxu0 0.0
  %62 = vmatpush.msra.mxu0 0.0
  %63 = vmatpush.msra.mxu0 0.0
  %64 = vmatpush.msra.mxu0 %v49
  %65 = vmatpush.msra.mxu0 %v38
  %66 = vmatpush.msra.mxu0 %v37
  %67 = vmatmul.f32.gmra.mxu0 %v42
  %v68 = vpop.f32.mrf.mxu0
  %v69 = vadd.f32 0.0, %v68
  %70 = vmatmul.f32.gmra.mxu0 %v45
  %v71 = vpop.f32.mrf.mxu0
  %v72 = vadd.f32 0.0, %v71
  %73 = vdwg.mxu0
  %v75 = vsel %vm40, %v29, 0
  %v78 = vsel %vm40, %v30, 0
  %v81 = vsel %vm47, %v33, 0
  %83 = vmatpush.msra.mxu0 0.0
  %84 = vmatpush.msra.mxu0 0.0
  %85 = vmatpush.msra.mxu0 0.0
  %86 = vmatpush.msra.mxu0 0.0
  %87 = vmatpush.msra.mxu0 0.0
  %88 = vmatpush.msra.mxu0 0.0
  %89 = vmatpush.msra.mxu0 0.0
  %90 = vmatpush.msra.mxu0 0.0
  %91 = vmatpush.msra.mxu0 0.0
  %92 = vmatpush.msra.mxu0 0.0
  %93 = vmatpush.msra.mxu0 0.0
  %94 = vmatpush.msra.mxu0 0.0
  %95 = vmatpush.msra.mxu0 0.0
  %96 = vmatpush.msra.mxu0 %v81
  %97 = vmatpush.msra.mxu0 %v32
  %98 = vmatpush.msra.mxu0 %v31
  %99 = vmatmul.f32.gmra.mxu0 %v75
  %v100 = vpop.f32.mrf.mxu0
  %v101 = vadd.f32 %v69, %v100
  %102 = vmatmul.f32.gmra.mxu0 %v78
  %v103 = vpop.f32.mrf.mxu0
  %v104 = vadd.f32 %v72, %v103
  %105 = vdwg.mxu0
  %v106 = vld [vmem:[%s1 + $0x2] sm:$0xff]
  %v107 = vld [vmem:[%s1 + $0xa] sm:$0xff]
  %s108 = scalar_lea.vmem %s2, 48
  %v109 = vld [vmem:[%s108] sm:$0xff]
  %v110 = vld [vmem:[%s108 + $0x8] sm:$0xff]
  %v111 = vld [vmem:[%s108 + $0x10] sm:$0x3]
  %v113 = vsel %vm40, %v106, 0
  %v116 = vsel %vm40, %v107, 0
  %v119 = vsel %vm47, %v111, 0
  %121 = vmatpush.msra.mxu0 0.0
  %122 = vmatpush.msra.mxu0 0.0
  %123 = vmatpush.msra.mxu0 0.0
  %124 = vmatpush.msra.mxu0 0.0
  %125 = vmatpush.msra.mxu0 0.0
  %126 = vmatpush.msra.mxu0 0.0
  %127 = vmatpush.msra.mxu0 0.0
  %128 = vmatpush.msra.mxu0 0.0
  %129 = vmatpush.msra.mxu0 0.0
  %130 = vmatpush.msra.mxu0 0.0
  %131 = vmatpush.msra.mxu0 0.0
  %132 = vmatpush.msra.mxu0 0.0
  %133 = vmatpush.msra.mxu0 0.0
  %134 = vmatpush.msra.mxu0 %v119
  %135 = vmatpush.msra.mxu0 %v110
  %136 = vmatpush.msra.mxu0 %v109
  %137 = vmatmul.f32.gmra.mxu0 %v113
  %v138 = vpop.f32.mrf.mxu0
  %v139 = vadd.f32 0.0, %v138
  %140 = vmatmul.f32.gmra.mxu0 %v116
  %v141 = vpop.f32.mrf.mxu0
  %v142 = vadd.f32 0.0, %v141
  %143 = vdwg.mxu0
  %v144 = vadd.f32 %v101, %v139
  %v145 = vadd.f32 %v104, %v142
  %v147 = vperm.slane %v27, 0
  %v149 = vadd.f32 %v144, %v147
  %v150 = vadd.f32 %v145, %v147
  %v151 = vmax.f32 %v149, 0.0
  %v152 = vmax.f32 %v150, 0.0
  %v153 = vmin.f32 %v151, 20.0
  %v154 = vmin.f32 %v152, 20.0
  %s155 = sld [smem:[#allocation3 + %s26]]
  %v156 = vstv %s155
  %vm157 = vcmp.lt.s32.totalorder %v28, %v156
  %v158 = vsel %vm157, 1, 0
  %v159 = vperm.slane %v158, 0
  %vm160 = vcmp.eq.s32.totalorder %v159, 1
  %v161 = vsel %vm160, %v153, 0.0
  %v162 = vsel %vm160, %v154, 0.0
  %163 = vst [vmem:[%s5] sm:$0xff] %v161
  %164 = vst [vmem:[%s5 + $0x8] sm:$0xff] %v162
  %s165 = scalar_lea.vmem %s1, 24
  %v166 = vld [vmem:[%s165] sm:$0xff]
  %v167 = vld [vmem:[%s165 + $0x8] sm:$0xff]
  %v168 = vld [vmem:[%s2] sm:$0xff]
  %v169 = vld [vmem:[%s2 + $0x8] sm:$0xff]
  %v170 = vld [vmem:[%s2 + $0x10] sm:$0x3]
  %v171 = vld [vmem:[%s165 + $0x1] sm:$0xff]
  %v172 = vld [vmem:[%s165 + $0x9] sm:$0xff]
  %v173 = vld [vmem:[%s36] sm:$0xff]
  %v174 = vld [vmem:[%s36 + $0x8] sm:$0xff]
  %v175 = vld [vmem:[%s36 + $0x10] sm:$0x3]
  %v177 = vsel %vm40, %v171, 0
  %v180 = vsel %vm40, %v172, 0
  %v183 = vsel %vm47, %v175, 0
  %185 = vmatpush.msra.mxu0 0.0
  %186 = vmatpush.msra.mxu0 0.0
  %187 = vmatpush.msra.mxu0 0.0
  %188 = vmatpush.msra.mxu0 0.0
  %189 = vmatpush.msra.mxu0 0.0
  %190 = vmatpush.msra.mxu0 0.0
  %191 = vmatpush.msra.mxu0 0.0
  %192 = vmatpush.msra.mxu0 0.0
  %193 = vmatpush.msra.mxu0 0.0
  %194 = vmatpush.msra.mxu0 0.0
  %195 = vmatpush.msra.mxu0 0.0
  %196 = vmatpush.msra.mxu0 0.0
  %197 = vmatpush.msra.mxu0 0.0
  %198 = vmatpush.msra.mxu0 %v183
  %199 = vmatpush.msra.mxu0 %v174
  %200 = vmatpush.msra.mxu0 %v173
  %201 = vmatmul.f32.gmra.mxu0 %v177
  %v202 = vpop.f32.mrf.mxu0
  %v203 = vadd.f32 0.0, %v202
  %204 = vmatmul.f32.gmra.mxu0 %v180
  %v205 = vpop.f32.mrf.mxu0
  %v206 = vadd.f32 0.0, %v205
  %207 = vdwg.mxu0
  %v209 = vsel %vm40, %v166, 0
  %v212 = vsel %vm40, %v167, 0
  %v215 = vsel %vm47, %v170, 0
  %217 = vmatpush.msra.mxu0 0.0
  %218 = vmatpush.msra.mxu0 0.0
  %219 = vmatpush.msra.mxu0 0.0
  %220 = vmatpush.msra.mxu0 0.0
  %221 = vmatpush.msra.mxu0 0.0
  %222 = vmatpush.msra.mxu0 0.0
  %223 = vmatpush.msra.mxu0 0.0
  %224 = vmatpush.msra.mxu0 0.0
  %225 = vmatpush.msra.mxu0 0.0
  %226 = vmatpush.msra.mxu0 0.0
  %227 = vmatpush.msra.mxu0 0.0
  %228 = vmatpush.msra.mxu0 0.0
  %229 = vmatpush.msra.mxu0 0.0
  %230 = vmatpush.msra.mxu0 %v215
  %231 = vmatpush.msra.mxu0 %v169
  %232 = vmatpush.msra.mxu0 %v168
  %233 = vmatmul.f32.gmra.mxu0 %v209
  %v234 = vpop.f32.mrf.mxu0
  %v235 = vadd.f32 %v203, %v234
  %236 = vmatmul.f32.gmra.mxu0 %v212
  %v237 = vpop.f32.mrf.mxu0
  %v238 = vadd.f32 %v206, %v237
  %239 = vdwg.mxu0
  %v240 = vld [vmem:[%s165 + $0x2] sm:$0xff]
  %v241 = vld [vmem:[%s165 + $0xa] sm:$0xff]
  %v242 = vld [vmem:[%s108] sm:$0xff]
  %v243 = vld [vmem:[%s108 + $0x8] sm:$0xff]
  %v244 = vld [vmem:[%s108 + $0x10] sm:$0x3]
  %v246 = vsel %vm40, %v240, 0
  %v249 = vsel %vm40, %v241, 0
  %v252 = vsel %vm47, %v244, 0
  %254 = vmatpush.msra.mxu0 0.0
  %255 = vmatpush.msra.mxu0 0.0
  %256 = vmatpush.msra.mxu0 0.0
  %257 = vmatpush.msra.mxu0 0.0
  %258 = vmatpush.msra.mxu0 0.0
  %259 = vmatpush.msra.mxu0 0.0
  %260 = vmatpush.msra.mxu0 0.0
  %261 = vmatpush.msra.mxu0 0.0
  %262 = vmatpush.msra.mxu0 0.0
  %263 = vmatpush.msra.mxu0 0.0
  %264 = vmatpush.msra.mxu0 0.0
  %265 = vmatpush.msra.mxu0 0.0
  %266 = vmatpush.msra.mxu0 0.0
  %267 = vmatpush.msra.mxu0 %v252
  %268 = vmatpush.msra.mxu0 %v243
  %269 = vmatpush.msra.mxu0 %v242
  %270 = vmatmul.f32.gmra.mxu0 %v246
  %v271 = vpop.f32.mrf.mxu0
  %v272 = vadd.f32 0.0, %v271
  %273 = vmatmul.f32.gmra.mxu0 %v249
  %v274 = vpop.f32.mrf.mxu0
  %v275 = vadd.f32 0.0, %v274
  %276 = vdwg.mxu0
  %v277 = vadd.f32 %v235, %v272
  %v278 = vadd.f32 %v238, %v275
  %v279 = vadd.f32 %v277, %v147
  %v280 = vadd.f32 %v278, %v147
  %v281 = vmax.f32 %v279, 0.0
  %v282 = vmax.f32 %v280, 0.0
  %v283 = vmin.f32 %v281, 20.0
  %v284 = vmin.f32 %v282, 20.0
  %s285 = sadd.s32 %s26, 1
  %s286 = sld [smem:[#allocation3 + %s285]]
  %v287 = vstv %s286
  %vm288 = vcmp.lt.s32.totalorder %v28, %v287
  %v289 = vsel %vm288, 1, 0
  %v290 = vperm.slane %v289, 0
  %vm291 = vcmp.eq.s32.totalorder %v290, 1
  %v292 = vsel %vm291, %v283, 0.0
  %v293 = vsel %vm291, %v284, 0.0
  %s294 = scalar_lea.vmem %s5, 16
  %295 = vst [vmem:[%s294] sm:$0xff] %v292
  %296 = vst [vmem:[%s294 + $0x8] sm:$0xff] %v293
  // Predicated region
  $region18: #{mask_conv.1} parent=0 // pred_check
    _
  $region19: #{mask_conv.1} parent=0 // pred_check_branch
    %298 = sbr.rel (0) target = $region21
  $region20: #{mask_conv.1} parent=0 // pred_region
    _
  $region21: #{mask_conv.1} parent=0 // pred_fallthru
    _
  // Predicated region
  $region22: #{mask_conv.1} parent=0 // pred_check
    _
  $region23: #{mask_conv.1} parent=0 // pred_check_branch
    %300 = sbr.rel (0) target = $region25
  $region24: #{mask_conv.1} parent=0 // pred_region
    _
  $region25: #{mask_conv.1} parent=0 // pred_fallthru
    _

</llo_original>
